<compile_context>
chip_gen: v6e
topology: v6e:2x2x1
jax: 0.10.0
libtpu: 0.0.40
codegen_flags: <defaults>
</compile_context>

<pallas_src>
import functools

import jax
import jax.numpy as jnp
from jax.experimental import pallas as pl
from jax.experimental.pallas import tpu as pltpu


def _pixel_kl_kernel(s_ref, t_ref, out_ref, *, inv_tau, valid_h, mask_rows):
    # s_ref / t_ref block: (1, C, tH, W); out_ref block: (1, 1, 1, W)
    s = s_ref[...].astype(jnp.float32)
    t = t_ref[...].astype(jnp.float32)
    if inv_tau != 1.0:           # compile-time branch: tau == 1.0 skips 2 muls/elem
        s = s * inv_tau
        t = t * inv_tau

    # Channel axis (=1) is a leading, non-minor axis: these reductions are
    # plain VPU max/add over (tH, W) vreg tiles (no cross-lane XLU work).
    s_sh = s - jnp.max(s, axis=1, keepdims=True)
    t_sh = t - jnp.max(t, axis=1, keepdims=True)

    e_t = jnp.exp(t_sh)                                    # reused below
    z_s = jnp.sum(jnp.exp(s_sh), axis=1, keepdims=True)    # (1,1,tH,W)
    z_t = jnp.sum(e_t, axis=1, keepdims=True)              # (1,1,tH,W)

    # KL(p_t || p_s) per pixel = (1/z_t) * sum_c e_t*(t_sh - s_sh) + log z_s - log z_t
    num = jnp.sum(e_t * (t_sh - s_sh), axis=1, keepdims=True)
    kl_pix = (num * pl.reciprocal(z_t, approx=True)        # EUP slot, not VALU
              + jnp.log(z_s) - jnp.log(z_t))               # (1,1,tH,W)

    if mask_rows:
        tH, W = s_ref.shape[2], s_ref.shape[3]
        is_last = pl.program_id(1) == pl.num_programs(1) - 1

        @pl.when(jnp.logical_not(is_last))
        def _():
            out_ref[...] = jnp.sum(kl_pix, axis=2, keepdims=True)

        @pl.when(is_last)
        def _():
            # Only the final H-block overhangs the array; zero its stale rows
            # (jnp.where is safe even if they produced nan/inf).
            row = (pl.program_id(1) * tH
                   + jax.lax.broadcasted_iota(jnp.int32, (1, 1, tH, W), 2))
            masked = jnp.where(row < valid_h, kl_pix, 0.0)
            out_ref[...] = jnp.sum(masked, axis=2, keepdims=True)
    else:
        out_ref[...] = jnp.sum(kl_pix, axis=2, keepdims=True)


def _vmem_capacity_bytes(default=128 * 1024 * 1024):
    try:
        info = pltpu.get_tpu_info()
        return int(getattr(info, "vmem_capacity_bytes", default))
    except Exception:
        return default


def _choose_tile_h(C, H, W, itemsize, budget_bytes, row_align):
    """Largest row_align-multiple tH whose estimated footprint fits budget.

    Estimate: 2 inputs x 2 pipeline buffers in native dtype + ~4 f32 full-tile
    temporaries inside the kernel (post algebraic simplification).
    """
    per_row = C * W * (4 * itemsize + 4 * 4)
    tH = int(budget_bytes // max(per_row, 1))
    tH = (tH // row_align) * row_align
    if tH >= H:
        return H                   # full extent is always a legal block dim
    tH = max(tH, row_align)
    # Prefer a nearby row-aligned divisor of H so no grid step needs row masking.
    cand = tH
    while cand >= max(row_align, (3 * tH) // 4):
        if H % cand == 0:
            return cand
        cand -= row_align
    return tH


def pixel_kl(logits_s, logits_t, tau=1.0, weight=1.0, tile_h=None):
    """Pallas implementation of PixelKL.forward (returns a scalar f32 loss)."""
    if logits_s.shape != logits_t.shape:
        raise ValueError("student/teacher logits must have identical shapes")
    B, C, H, W = logits_t.shape
    N = B * H * W

    itemsize = jnp.dtype(logits_t.dtype).itemsize
    # Packed-sublane alignment: 8 rows for 32-bit, 16 for 16-bit, 32 for 8-bit.
    row_align = max(8, 32 // max(itemsize, 1))

    vmem_cap = _vmem_capacity_bytes()
    tile_budget = vmem_cap // 2            # ~64 MiB on v5e/v6e, ~32 MiB on v7x
    vmem_limit = (vmem_cap * 3) // 4       # ~96 MiB on v5e/v6e, ~48 MiB on v7x

    if tile_h is None:
        tH = _choose_tile_h(C, H, W, itemsize, tile_budget, row_align)
    else:
        tH = min(int(tile_h), H)
        if tH < H:
            tH = max(row_align, (tH // row_align) * row_align)
    nH = pl.cdiv(H, tH)

    # Guarantee a few grid steps so (a) both v7x TensorCores get work and
    # (b) the software pipeline has steps to overlap DMA with compute.
    MIN_STEPS = 4
    while B * nH < MIN_STEPS and tH > row_align:
        new_tH = max(row_align, ((tH // 2) // row_align) * row_align)
        if new_tH == tH:
            break
        tH = new_tH
        nH = pl.cdiv(H, tH)

    mask_rows = (H % tH) != 0

    kernel = functools.partial(
        _pixel_kl_kernel,
        inv_tau=float(1.0 / tau),     # plain Python scalars: no captured consts
        valid_h=int(H),
        mask_rows=bool(mask_rows),
    )

    partials = pl.pallas_call(
        kernel,
        out_shape=jax.ShapeDtypeStruct((B, nH, 1, W), jnp.float32),
        grid_spec=pltpu.PrefetchScalarGridSpec(
            num_scalar_prefetch=0,
            grid=(B, nH),
            in_specs=[
                pl.BlockSpec((1, C, tH, W), lambda b, j: (b, 0, j, 0)),
                pl.BlockSpec((1, C, tH, W), lambda b, j: (b, 0, j, 0)),
            ],
            out_specs=pl.BlockSpec((1, 1, 1, W), lambda b, j: (b, j, 0, 0)),
        ),
        compiler_params=pltpu.CompilerParams(
            dimension_semantics=("parallel", "parallel"),
            vmem_limit_bytes=int(vmem_limit),
        ),
    )(logits_s, logits_t)

    # reduction='batchmean' divides by the number of rows of the (-1, C) view.
    return (weight * (tau ** 2)) * jnp.sum(partials) / N


def _pixel_kl_ref(logits_s, logits_t, tau=1.0, weight=1.0):
    B, C, H, W = logits_t.shape
    s = jnp.transpose(logits_s, (0, 2, 3, 1)).reshape(-1, C) / tau
    t = jnp.transpose(logits_t, (0, 2, 3, 1)).reshape(-1, C) / tau
    log_ps = jax.nn.log_softmax(s, axis=1)
    log_pt = jax.nn.log_softmax(t, axis=1)
    p_t = jnp.exp(log_pt)
    kl = jnp.sum(p_t * (log_pt - log_ps)) / s.shape[0]
    return weight * (tau ** 2) * kl


if __name__ == "__main__":
    key = jax.random.PRNGKey(0)
    k1, k2 = jax.random.split(key)
    B, C, H, W = 2, 4, 16, 16
    logits_s = jax.random.normal(k1, (B, C, H, W), dtype=jnp.float32)
    logits_t = jax.random.normal(k2, (B, C, H, W), dtype=jnp.float32)

    for tau, weight in ((1.0, 1.0), (2.0, 0.5)):
        loss = pixel_kl(logits_s, logits_t, tau=tau, weight=weight)
        loss = jax.block_until_ready(loss)
        ref = _pixel_kl_ref(logits_s, logits_t, tau=tau, weight=weight)
        # Tolerance accounts for the EUP approx reciprocal on the per-pixel
        # 1/z_t; still far tighter than any formula/scaling error would allow.
        assert jnp.allclose(loss, ref, rtol=2e-3, atol=2e-4), (tau, weight, loss, ref)

    print("KERNEL_OK")
</pallas_src>

<mosaic_0001>
module attributes {stable_mosaic.version = 11 : i64} {
  func.func @_pixel_kl_kernel(%arg0: i32, %arg1: i32, %arg2: memref<1x4x8x16xf32, #tpu.memory_space<vmem>>, %arg3: memref<1x4x8x16xf32, #tpu.memory_space<vmem>>, %arg4: memref<1x1x1x16xf32, #tpu.memory_space<vmem>>) attributes {dimension_semantics = [#tpu.dimension_semantics<parallel>, #tpu.dimension_semantics<parallel>], iteration_bounds = array<i64: 2, 2>, scalar_prefetch = 0 : i64, scratch_operands = 0 : i64, tpu.core_type = #tpu.core_type<tc>, window_params = [{transform_indices = @transform_0, window_bounds = array<i64: 1, 4, 8, 16>}, {transform_indices = @transform_1, window_bounds = array<i64: 1, 4, 8, 16>}, {transform_indices = @transform_2, window_bounds = array<i64: 1, 1, 1, 16>}]} {
    %c0 = arith.constant 0 : index
    %c0_0 = arith.constant 0 : index
    %c0_1 = arith.constant 0 : index
    %c0_2 = arith.constant 0 : index
    %0 = vector.load %arg2[%c0, %c0_0, %c0_1, %c0_2] : memref<1x4x8x16xf32, #tpu.memory_space<vmem>>, vector<1x4x8x16xf32>
    %c0_3 = arith.constant 0 : index
    %c0_4 = arith.constant 0 : index
    %c0_5 = arith.constant 0 : index
    %c0_6 = arith.constant 0 : index
    %1 = vector.load %arg3[%c0_3, %c0_4, %c0_5, %c0_6] : memref<1x4x8x16xf32, #tpu.memory_space<vmem>>, vector<1x4x8x16xf32>
    %cst = arith.constant dense<0xFF800000> : vector<1x8x16xf32>
    %2 = vector.multi_reduction <maximumf>, %0, %cst [1] : vector<1x4x8x16xf32> to vector<1x8x16xf32>
    %3 = vector.shape_cast %2 : vector<1x8x16xf32> to vector<1x1x8x16xf32>
    %4 = vector.broadcast %3 : vector<1x1x8x16xf32> to vector<1x4x8x16xf32>
    %5 = arith.subf %0, %4 : vector<1x4x8x16xf32>
    %cst_7 = arith.constant dense<0xFF800000> : vector<1x8x16xf32>
    %6 = vector.multi_reduction <maximumf>, %1, %cst_7 [1] : vector<1x4x8x16xf32> to vector<1x8x16xf32>
    %7 = vector.shape_cast %6 : vector<1x8x16xf32> to vector<1x1x8x16xf32>
    %8 = vector.broadcast %7 : vector<1x1x8x16xf32> to vector<1x4x8x16xf32>
    %9 = arith.subf %1, %8 : vector<1x4x8x16xf32>
    %10 = math.exp %9 : vector<1x4x8x16xf32>
    %11 = math.exp %5 : vector<1x4x8x16xf32>
    %cst_8 = arith.constant dense<0.000000e+00> : vector<1x8x16xf32>
    %12 = vector.multi_reduction <add>, %11, %cst_8 [1] : vector<1x4x8x16xf32> to vector<1x8x16xf32>
    %13 = vector.shape_cast %12 : vector<1x8x16xf32> to vector<1x1x8x16xf32>
    %cst_9 = arith.constant dense<0.000000e+00> : vector<1x8x16xf32>
    %14 = vector.multi_reduction <add>, %10, %cst_9 [1] : vector<1x4x8x16xf32> to vector<1x8x16xf32>
    %15 = vector.shape_cast %14 : vector<1x8x16xf32> to vector<1x1x8x16xf32>
    %16 = arith.subf %9, %5 : vector<1x4x8x16xf32>
    %17 = arith.mulf %10, %16 : vector<1x4x8x16xf32>
    %cst_10 = arith.constant dense<0.000000e+00> : vector<1x8x16xf32>
    %18 = vector.multi_reduction <add>, %17, %cst_10 [1] : vector<1x4x8x16xf32> to vector<1x8x16xf32>
    %19 = vector.shape_cast %18 : vector<1x8x16xf32> to vector<1x1x8x16xf32>
    %20 = tpu.reciprocal %15 {approx = true} : vector<1x1x8x16xf32> -> vector<1x1x8x16xf32>
    %21 = arith.mulf %19, %20 : vector<1x1x8x16xf32>
    %22 = math.log %13 : vector<1x1x8x16xf32>
    %23 = arith.addf %21, %22 : vector<1x1x8x16xf32>
    %24 = math.log %15 : vector<1x1x8x16xf32>
    %25 = arith.subf %23, %24 : vector<1x1x8x16xf32>
    %cst_11 = arith.constant dense<0.000000e+00> : vector<1x1x16xf32>
    %26 = vector.multi_reduction <add>, %25, %cst_11 [2] : vector<1x1x8x16xf32> to vector<1x1x16xf32>
    %27 = vector.shape_cast %26 : vector<1x1x16xf32> to vector<1x1x1x16xf32>
    %c0_12 = arith.constant 0 : index
    %c0_13 = arith.constant 0 : index
    %c0_14 = arith.constant 0 : index
    %c0_15 = arith.constant 0 : index
    %28 = vector.load %arg4[%c0_12, %c0_13, %c0_14, %c0_15] : memref<1x1x1x16xf32, #tpu.memory_space<vmem>>, vector<1x1x1x16xf32>
    tpu.vector_store %arg4[%c0_12, %c0_13, %c0_14, %c0_15], %27 {strides = array<i32>} : memref<1x1x1x16xf32, #tpu.memory_space<vmem>>, vector<1x1x1x16xf32>,
    return
  }
  func.func @transform_0(%arg0: i32, %arg1: i32) -> (i32, i32, i32, i32) {
    %c0_i32 = arith.constant 0 : i32
    %c0_i32_0 = arith.constant 0 : i32
    %c0_i32_1 = arith.constant 0 : i32
    return %arg0, %c0_i32, %arg1, %c0_i32_0 : i32, i32, i32, i32
  }
  func.func @transform_1(%arg0: i32, %arg1: i32) -> (i32, i32, i32, i32) {
    %c0_i32 = arith.constant 0 : i32
    %c0_i32_0 = arith.constant 0 : i32
    %c0_i32_1 = arith.constant 0 : i32
    return %arg0, %c0_i32, %arg1, %c0_i32_0 : i32, i32, i32, i32
  }
  func.func @transform_2(%arg0: i32, %arg1: i32) -> (i32, i32, i32, i32) {
    %c0_i32 = arith.constant 0 : i32
    %c0_i32_0 = arith.constant 0 : i32
    %c0_i32_1 = arith.constant 0 : i32
    return %arg0, %arg1, %c0_i32, %c0_i32_0 : i32, i32, i32, i32
  }
}

</mosaic_0001>

<llo_original>
// kernel: tpu_custom_call.1
$region0: #{tpu_custom_call.1}
  #allocation0 [shape = 'u32[]', space=smem, size = 0x4, offset = 0x4, fixed_abs, tag = 'smem constant byte address 0x4 - core index']
  #allocation1 [shape = 'u32[144,128]{1,0:T(1,128)}', space=vmem, size = 0x12000, scoped, tag = 'internal scratch']
  %s0 = inlined_call_operand.hbm [shape: f32[2,4,16,16], index: 0, kind: input, shape index: {}]
  %s1 = inlined_call_operand.hbm [shape: f32[2,4,16,16], index: 1, kind: input, shape index: {}]
  %s2 = inlined_call_operand.hbm [shape: f32[2,2,1,16], index: 2, kind: output, shape index: {}]
  %s3 = sld [smem:[#allocation0]]
  $region49: #{tpu_custom_call.1} parent=0
    _
  %s5 = ssub.s32 1, %s3
  %s6 = scalar_select 0, %s5, %s3
  $region1: #{tpu_custom_call.1} parent=0
    #allocation2 [shape = 'u8[32768]{0}', space=vmem, size = 0x8000, scoped, tag = 'input window, operand 0']
    #allocation3 [shape = 's32[2]{0}', space=sflag, size = 0x8, scoped, tag = 'scoped memory for tpu_custom_call.1']
    #allocation4 [shape = 's32[2]{0}', space=sflag, size = 0x8, scoped, tag = 'scoped memory for tpu_custom_call.1']
    #allocation5 [shape = 'u8[32768]{0}', space=vmem, size = 0x8000, scoped, tag = 'input window, operand 1']
    #allocation6 [shape = 's32[2]{0}', space=sflag, size = 0x8, scoped, tag = 'scoped memory for tpu_custom_call.1']
    #allocation7 [shape = 'u8[1024]{0}', space=vmem, size = 0x400, scoped, tag = 'output window, operand 0']
    %7 = vsyncpa [#allocation3], 0
    %s8 = scalar_lea.sflag [#allocation3], 1
    %9 = vsyncpa %s8, 0
    %10 = vsyncpa [#allocation6], 0
    %s11 = scalar_lea.sflag [#allocation6], 1
    %12 = vsyncpa %s11, 0
    %13 = vsyncpa [#allocation4], 0
    %s14 = scalar_lea.sflag [#allocation4], 1
    %15 = vsyncpa %s14, 0
    loop: start=0, step=1, limit=6
    $region2: #{tpu_custom_call.1} parent=1 // loop_pre_header
      _
    $region3: #{tpu_custom_call.1} parent=1 // loop_header
      %s17 = sphi 0, %s21
      %p18 = scmp.ge.s32.totalorder %s17, 6
      %s24 = sphi 0, %s36
      %s25 = sphi 0, %s32
      %s26 = sphi 0, %s24
      %s27 = sphi 0, %s25
      %s28 = sphi 0, %s26
      %s29 = sphi 0, %s27
      %s41 = sphi 0, %s43
      %s44 = sphi 0, %s41
      %s45 = sphi 0, %s44
      %s61 = sphi 0, %s45
      %s69 = sphi 0, %s71
      %s72 = sphi 0, %s69
      %s73 = sphi 0, %s72
      %s89 = sphi 0, %s73
      %s97 = sphi 0, %s99
      %s100 = sphi 0, %s97
      %s101 = sphi 0, %s100
      %s117 = sphi 0, %s101
    $region4: #{tpu_custom_call.1} parent=1 // loop_header_branch
      %20 = sbr.rel (%p18) target = $region8
    $region5: #{tpu_custom_call.1} parent=1 // loop_body
      %s22 = ssub.s32 %s17, 1
      %s23 = ssub.s32 %s17, 2
      %s30 = sadd.s32 1, %s25
      %p31 = scmp.ge.s32.totalorder %s30, 2
      %s32 = scalar_select %p31, 0, %s30
      %s33 = sadd.s32 1, %s24
      %s34 = scalar_select %p31, %s33, %s24
      %p35 = scmp.ge.s32.totalorder %s34, 2
      %s36 = scalar_select %p35, 0, %s34
      %s37 = ssub.s32 %s24, %s36
      %s38 = ssub.s32 %s25, %s32
      %s39 = sor.u32 %s37, %s38
      %p40 = scmp.eq.s32.totalorder %s39, 0
      %s42 = sadd.s32 %s41, 1
      %s43 = scalar_select %p40, %s41, %s42
      %p46 = pneg %p40
      %p47 = scmp.eq.s32.totalorder %s17, 3
      %p48 = por %p46, %p47
      %p49 = scmp.ne.s32.totalorder %s41, %s44
      %p50 = scmp.eq.s32.totalorder %s17, 0
      %p51 = por %p49, %p50
      %p52 = scmp.ne.s32.totalorder %s41, %s44
      %p53 = scmp.eq.s32.totalorder %s22, 3
      %p54 = por %p52, %p53
      %p55 = scmp.ne.s32.totalorder %s44, %s45
      %p56 = scmp.eq.s32.totalorder %s22, 0
      %p57 = por %p55, %p56
      %p58 = scmp.ne.s32.totalorder %s44, %s45
      %p59 = scmp.eq.s32.totalorder %s23, 3
      %p60 = por %p58, %p59
      %p62 = scmp.ne.s32.totalorder %s45, %s61
      %p63 = scmp.eq.s32.totalorder %s23, 0
      %p64 = por %p62, %p63
      %s65 = ssub.s32 %s24, %s36
      %s66 = ssub.s32 %s25, %s32
      %s67 = sor.u32 %s65, %s66
      %p68 = scmp.eq.s32.totalorder %s67, 0
      %s70 = sadd.s32 %s69, 1
      %s71 = scalar_select %p68, %s69, %s70
      %p74 = pneg %p68
      %p75 = scmp.eq.s32.totalorder %s17, 3
      %p76 = por %p74, %p75
      %p77 = scmp.ne.s32.totalorder %s69, %s72
      %p78 = scmp.eq.s32.totalorder %s17, 0
      %p79 = por %p77, %p78
      %p80 = scmp.ne.s32.totalorder %s69, %s72
      %p81 = scmp.eq.s32.totalorder %s22, 3
      %p82 = por %p80, %p81
      %p83 = scmp.ne.s32.totalorder %s72, %s73
      %p84 = scmp.eq.s32.totalorder %s22, 0
      %p85 = por %p83, %p84
      %p86 = scmp.ne.s32.totalorder %s72, %s73
      %p87 = scmp.eq.s32.totalorder %s23, 3
      %p88 = por %p86, %p87
      %p90 = scmp.ne.s32.totalorder %s73, %s89
      %p91 = scmp.eq.s32.totalorder %s23, 0
      %p92 = por %p90, %p91
      %s93 = ssub.s32 %s24, %s36
      %s94 = ssub.s32 %s25, %s32
      %s95 = sor.u32 %s93, %s94
      %p96 = scmp.eq.s32.totalorder %s95, 0
      %s98 = sadd.s32 %s97, 1
      %s99 = scalar_select %p96, %s97, %s98
      %p102 = pneg %p96
      %p103 = scmp.eq.s32.totalorder %s17, 3
      %p104 = por %p102, %p103
      %p105 = scmp.ne.s32.totalorder %s97, %s100
      %p106 = scmp.eq.s32.totalorder %s17, 0
      %p107 = por %p105, %p106
      %p108 = scmp.ne.s32.totalorder %s97, %s100
      %p109 = scmp.eq.s32.totalorder %s22, 3
      %p110 = por %p108, %p109
      %p111 = scmp.ne.s32.totalorder %s100, %s101
      %p112 = scmp.eq.s32.totalorder %s22, 0
      %p113 = por %p111, %p112
      %p114 = scmp.ne.s32.totalorder %s100, %s101
      %p115 = scmp.eq.s32.totalorder %s23, 3
      %p116 = por %p114, %p115
      %p118 = scmp.ne.s32.totalorder %s101, %s117
      %p119 = scmp.eq.s32.totalorder %s23, 0
      %p120 = por %p118, %p119
      %p121 = scmp.le.s32.totalorder 1, %s17
      %p122 = scmp.lt.s32.totalorder %s17, 5
      %p123 = pnand %p121, %p122
      %p124 = pneg %p123
      // Predicated region
      $region9: #{tpu_custom_call.1} parent=5 // pred_check
        _
      $region10: #{tpu_custom_call.1} parent=5 // pred_check_branch
        %126 = sbr.rel (%p123) target = $region12
      $region11: #{tpu_custom_call.1} parent=5 // pred_region
        %s127 = ssub.s32 %s17, 1
      $region12: #{tpu_custom_call.1} parent=5 // pred_fallthru
        _
      %p128 = scmp.lt.s32.totalorder %s17, 4
      // Predicated region
      $region13: #{tpu_custom_call.1} parent=5 // pred_check
        %p129 = pneg %p128
      $region14: #{tpu_custom_call.1} parent=5 // pred_check_branch
        %131 = sbr.rel (%p129) target = $region16
      $region15: #{tpu_custom_call.1} parent=5 // pred_region
        // Predicated region
        $region17: #{tpu_custom_call.1} parent=15 // pred_check
          %p132 = pneg %p51
        $region18: #{tpu_custom_call.1} parent=15 // pred_check_branch
          %134 = sbr.rel (%p132) target = $region20
        $region19: #{tpu_custom_call.1} parent=15 // pred_region
          %s135 = sand.u32 %s41, 1
          %s136 = scalar_lea.sflag [#allocation3], %s135
          %s137 = sand.u32 %s41, 1
          %s138 = smul.addr %s137, 32
          %s139 = scalar_lea.vmem [#allocation2], %s138
          %s141 = ssub.s32 512, 512
          %142 = vsyncadd %s136, %s141
          %s143 = smul.addr %s24, 8
          %s144 = sadd.s32 %s25, %s143
          %s145 = smul.addr %s144, 128
          %s146 = scalar_lea.hbm %s0, %s145
          %s147 = sshll.u32 %s139, 4
          %s148 = int_to_ptr.vmem [resolvable:$true] %s147
          %153 = dma.hbm_to_vmem [thread:$0]  %s146, 512, %s148, %s136, 256, 128, 8
        $region20: #{tpu_custom_call.1} parent=15 // pred_fallthru
          _
        // Predicated region
        $region21: #{tpu_custom_call.1} parent=15 // pred_check
          %p154 = pneg %p79
        $region22: #{tpu_custom_call.1} parent=15 // pred_check_branch
          %156 = sbr.rel (%p154) target = $region24
        $region23: #{tpu_custom_call.1} parent=15 // pred_region
          %s157 = sand.u32 %s69, 1
          %s158 = scalar_lea.sflag [#allocation6], %s157
          %s159 = sand.u32 %s69, 1
          %s160 = smul.addr %s159, 32
          %s161 = scalar_lea.vmem [#allocation5], %s160
          %s163 = ssub.s32 512, 512
          %164 = vsyncadd %s158, %s163
          %s165 = smul.addr %s24, 8
          %s166 = sadd.s32 %s25, %s165
          %s167 = smul.addr %s166, 128
          %s168 = scalar_lea.hbm %s1, %s167
          %s169 = sshll.u32 %s161, 4
          %s170 = int_to_ptr.vmem [resolvable:$true] %s169
          %175 = dma.hbm_to_vmem [thread:$0]  %s168, 512, %s170, %s158, 256, 128, 8
        $region24: #{tpu_custom_call.1} parent=15 // pred_fallthru
          _
      $region16: #{tpu_custom_call.1} parent=5 // pred_fallthru
        _
      %p176 = scmp.le.s32.totalorder 1, %s17
      %p177 = scmp.lt.s32.totalorder %s17, 5
      %p178 = pnand %p176, %p177
      %p179 = pneg %p178
      // Predicated region
      $region25: #{tpu_custom_call.1} parent=5 // pred_check
        _
      $region26: #{tpu_custom_call.1} parent=5 // pred_check_branch
        %181 = sbr.rel (%p178) target = $region28
      $region27: #{tpu_custom_call.1} parent=5 // pred_region
        %s182 = ssub.s32 %s17, 1
        %s183 = sand.u32 %s44, 1
        %s184 = scalar_lea.sflag [#allocation3], %s183
        %s185 = sand.u32 %s44, 1
        %s186 = smul.addr %s185, 32
        %s187 = scalar_lea.vmem [#allocation2], %s186
        // Predicated region
        $region29: #{tpu_custom_call.1} parent=27 // pred_check
          %p188 = pneg %p57
        $region30: #{tpu_custom_call.1} parent=27 // pred_check_branch
          %190 = sbr.rel (%p188) target = $region32
        $region31: #{tpu_custom_call.1} parent=27 // pred_region
          %191 = dma.done %s184, 512
        $region32: #{tpu_custom_call.1} parent=27 // pred_fallthru
          _
        %s192 = sand.u32 %s72, 1
        %s193 = scalar_lea.sflag [#allocation6], %s192
        %s194 = sand.u32 %s72, 1
        %s195 = smul.addr %s194, 32
        %s196 = scalar_lea.vmem [#allocation5], %s195
        // Predicated region
        $region33: #{tpu_custom_call.1} parent=27 // pred_check
          %p197 = pneg %p85
        $region34: #{tpu_custom_call.1} parent=27 // pred_check_branch
          %199 = sbr.rel (%p197) target = $region36
        $region35: #{tpu_custom_call.1} parent=27 // pred_region
          %200 = dma.done %s193, 512
        $region36: #{tpu_custom_call.1} parent=27 // pred_fallthru
          _
        %s201 = sand.u32 %s44, 1
        %s202 = scalar_lea.sflag [#allocation3], %s201
        %s203 = sand.u32 %s44, 1
        %s204 = smul.addr %s203, 32
        %s205 = scalar_lea.vmem [#allocation2], %s204
        %p206 = pneg %p57
        %p207 = pneg %p54
        %s208 = sand.u32 %s72, 1
        %s209 = scalar_lea.sflag [#allocation6], %s208
        %s210 = sand.u32 %s72, 1
        %s211 = smul.addr %s210, 32
        %s212 = scalar_lea.vmem [#allocation5], %s211
        %p213 = pneg %p85
        %p214 = pneg %p82
        %p215 = pneg %p113
        %p216 = pneg %p110
        %s217 = sand.u32 %s100, 1
        %s218 = scalar_lea.sflag [#allocation4], %s217
        %s219 = sand.u32 %s100, 1
        %s220 = scalar_lea.vmem [#allocation7], %s219
        %v221 = vld [vmem:[%s187] sm:$0xff]
        %v222 = vld [vmem:[%s187 + $0x8] sm:$0xff]
        %v223 = vld [vmem:[%s187 + $0x10] sm:$0xff]
        %v224 = vld [vmem:[%s187 + $0x18] sm:$0xff]
        %v225 = vld [vmem:[%s196] sm:$0xff]
        %v226 = vld [vmem:[%s196 + $0x8] sm:$0xff]
        %v227 = vld [vmem:[%s196 + $0x10] sm:$0xff]
        %v228 = vld [vmem:[%s196 + $0x18] sm:$0xff]
        %vm229 = vcmask 130048
        %v230 = vsel %vm229, %v221, -inf
        %v231 = vsel %vm229, %v222, -inf
        %v232 = vsel %vm229, %v223, -inf
        %v233 = vsel %vm229, %v224, -inf
        %v234 = vmax.f32 %v230, %v231
        %v235 = vmax.f32 %v232, %v233
        %v236 = vmax.f32 %v234, %v235
        %v237 = vsub.f32 %v221, %v236
        %v238 = vsub.f32 %v222, %v236
        %v239 = vsub.f32 %v223, %v236
        %v240 = vsub.f32 %v224, %v236
        %v241 = vsel %vm229, %v225, -inf
        %v242 = vsel %vm229, %v226, -inf
        %v243 = vsel %vm229, %v227, -inf
        %v244 = vsel %vm229, %v228, -inf
        %v245 = vmax.f32 %v241, %v242
        %v246 = vmax.f32 %v243, %v244
        %v247 = vmax.f32 %v245, %v246
        %v248 = vsub.f32 %v225, %v247
        %v249 = vsub.f32 %v226, %v247
        %v250 = vsub.f32 %v227, %v247
        %v251 = vsub.f32 %v228, %v247
        %v252 = vmul.f32 %v248, 1.442695
        %v253 = vpow.pop %v252
        %v254 = vmul.f32 %v249, 1.442695
        %v255 = vpow.pop %v254
        %v256 = vmul.f32 %v250, 1.442695
        %v257 = vpow.pop %v256
        %v258 = vmul.f32 %v251, 1.442695
        %v259 = vpow.pop %v258
        %v260 = vmul.f32 %v237, 1.442695
        %v261 = vpow.pop %v260
        %v262 = vmul.f32 %v238, 1.442695
        %v263 = vpow.pop %v262
        %v264 = vmul.f32 %v239, 1.442695
        %v265 = vpow.pop %v264
        %v266 = vmul.f32 %v240, 1.442695
        %v267 = vpow.pop %v266
        %v268 = vsel %vm229, %v261, 0.0
        %v269 = vsel %vm229, %v263, 0.0
        %v270 = vadd.f32 %v268, %v269
        %v271 = vsel %vm229, %v265, 0.0
        %v272 = vadd.f32 %v270, %v271
        %v273 = vsel %vm229, %v267, 0.0
        %v274 = vadd.f32 %v272, %v273
        %v275 = vsel %vm229, %v253, 0.0
        %v276 = vsel %vm229, %v255, 0.0
        %v277 = vadd.f32 %v275, %v276
        %v278 = vsel %vm229, %v257, 0.0
        %v279 = vadd.f32 %v277, %v278
        %v280 = vsel %vm229, %v259, 0.0
        %v281 = vadd.f32 %v279, %v280
        %v282 = vsub.f32 %v248, %v237
        %v283 = vsub.f32 %v249, %v238
        %v284 = vsub.f32 %v250, %v239
        %v285 = vsub.f32 %v251, %v240
        %v286 = vmul.f32 %v253, %v282
        %v287 = vmul.f32 %v255, %v283
        %v288 = vmul.f32 %v257, %v284
        %v289 = vmul.f32 %v259, %v285
        %v290 = vsel %vm229, %v286, 0.0
        %v291 = vsel %vm229, %v287, 0.0
        %v292 = vadd.f32 %v290, %v291
        %v293 = vsel %vm229, %v288, 0.0
        %v294 = vadd.f32 %v292, %v293
        %v295 = vsel %vm229, %v289, 0.0
        %v296 = vadd.f32 %v294, %v295
        %v297 = vrcp.pop %v281
        %v298 = vmul.f32 %v296, %v297
        %v299 = vlog2.pop %v274
        %v300 = vmul.f32 %v299, 0.6931472
        %v301 = vadd.f32 %v298, %v300
        %v302 = vlog2.pop %v281
        %v303 = vmul.f32 %v302, 0.6931472
        %v304 = vsub.f32 %v301, %v303
        %v305 = vsel %vm229, %v304, 0.0
        %v306 = vrot.slane %v305, 4
        %v307 = vadd.f32 %v305, %v306
        %v308 = vrot.slane %v307, 2
        %v309 = vadd.f32 %v307, %v308
        %v310 = vrot.slane %v309, 1
        %v311 = vadd.f32 %v309, %v310
        %vm312 = vcmask 122880
        %313 = vst.msk [vmem:[%s220] sm:$0x1] %vm312, %v311
        %s314 = sand.u32 %s100, 1
        %s315 = scalar_lea.sflag [#allocation4], %s314
        %s316 = sand.u32 %s100, 1
        %s317 = scalar_lea.vmem [#allocation7], %s316
        // Predicated region
        $region37: #{tpu_custom_call.1} parent=27 // pred_check
          %p318 = pneg %p110
        $region38: #{tpu_custom_call.1} parent=27 // pred_check_branch
          %320 = sbr.rel (%p318) target = $region40
        $region39: #{tpu_custom_call.1} parent=27 // pred_region
          %s322 = ssub.s32 16, 16
          %323 = vsyncadd %s315, %s322
          %s324 = smul.addr %s26, 2
          %s325 = sadd.s32 %s27, %s324
          %s326 = smul.addr %s325, 16
          %s327 = scalar_lea.hbm %s2, %s326
          %s329 = sshll.u32 %s317, 4
          %s330 = int_to_ptr.vmem [resolvable:$true] %s329
          %332 = dma.vmem_to_hbm [thread:$0]  %s330, 16, %s327, %s315
        $region40: #{tpu_custom_call.1} parent=27 // pred_fallthru
          _
      $region28: #{tpu_custom_call.1} parent=5 // pred_fallthru
        _
      %p333 = scmp.le.s32.totalorder 2, %s17
      // Predicated region
      $region41: #{tpu_custom_call.1} parent=5 // pred_check
        %p334 = pneg %p333
      $region42: #{tpu_custom_call.1} parent=5 // pred_check_branch
        %336 = sbr.rel (%p334) target = $region44
      $region43: #{tpu_custom_call.1} parent=5 // pred_region
        %s337 = ssub.s32 %s17, 2
        // Predicated region
        $region45: #{tpu_custom_call.1} parent=43 // pred_check
          %p338 = pneg %p116
        $region46: #{tpu_custom_call.1} parent=43 // pred_check_branch
          %340 = sbr.rel (%p338) target = $region48
        $region47: #{tpu_custom_call.1} parent=43 // pred_region
          %s341 = sand.u32 %s101, 1
          %s342 = scalar_lea.sflag [#allocation4], %s341
          %s343 = sand.u32 %s101, 1
          %s344 = scalar_lea.vmem [#allocation7], %s343
          %345 = dma.done %s342, 16
        $region48: #{tpu_custom_call.1} parent=43 // pred_fallthru
          _
      $region44: #{tpu_custom_call.1} parent=5 // pred_fallthru
        _
    $region6: #{tpu_custom_call.1} parent=1 // loop_footer
      %s21 = sadd.s32 1, %s17
    $region7: #{tpu_custom_call.1} parent=1 // loop_footer_branch
      %16 = sbr.rel target = $region3
    $region8: #{tpu_custom_call.1} parent=1 // loop_exit
      _
    %346 = vsyncpa [#allocation3], 1
    %s347 = scalar_lea.sflag [#allocation3], 1
    %348 = vsyncpa %s347, 1
    %349 = vsyncpa [#allocation6], 1
    %s350 = scalar_lea.sflag [#allocation6], 1
    %351 = vsyncpa %s350, 1
    %352 = vsyncpa [#allocation4], 1
    %s353 = scalar_lea.sflag [#allocation4], 1
    %354 = vsyncpa %s353, 1

</llo_original>
